<compile_context>
chip_gen: v7x
topology: tpu7x:2x2x1
jax: 0.10.0
libtpu: 0.0.40
codegen_flags: <defaults>
</compile_context>

<pallas_src>
import jax
import jax.numpy as jnp
from jax import lax
from jax.experimental import pallas as pl
from jax.experimental.pallas import tpu as pltpu

EPS = 1e-5  # PyTorch BatchNorm1d default


def _bn_relu_f32(y, gb_ref):
    """Training-mode BatchNorm1d + ReLU on an f32 (B, tn) tile.

    One-sweep statistics: var = E[y^2] - mean^2 (clamped at 0 against f32
    rounding); gamma folded into the rsqrt scale, mean folded into the shift.
    """
    inv_b = 1.0 / y.shape[0]
    mean = jnp.sum(y, axis=0, keepdims=True) * inv_b           # (1, tn)
    mean_sq = jnp.sum(y * y, axis=0, keepdims=True) * inv_b    # (1, tn)
    var = jnp.maximum(mean_sq - mean * mean, 0.0)
    gamma = gb_ref[0:1, :]                                     # (1, tn)
    beta = gb_ref[1:2, :]                                      # (1, tn)
    scale = gamma * lax.rsqrt(var + EPS)                       # (1, tn)
    shift = beta - mean * scale                                # (1, tn)
    return jnp.maximum(y * scale + shift, 0.0)


def linear_bn_relu_kernel_1k(x_ref, wt_ref, gb_ref, o_ref):
    # Grid: (n_out // tn,).  Whole K reduction in one MXU call; no scratch.
    y = jnp.dot(x_ref[...].astype(wt_ref.dtype), wt_ref[...],
                preferred_element_type=jnp.float32)
    o_ref[...] = _bn_relu_f32(y, gb_ref).astype(o_ref.dtype)


def linear_bn_relu_kernel_multik(x_ref, wt_ref, gb_ref, o_ref, acc_ref):
    # Grid: (n_out // tn, n_input // tk); K (reduction) axis last.
    k = pl.program_id(1)
    part = jnp.dot(x_ref[...].astype(wt_ref.dtype), wt_ref[...],
                   preferred_element_type=jnp.float32)

    @pl.when(k == 0)
    def _():
        acc_ref[...] = part                  # direct write: no zero-init pass

    @pl.when(k > 0)
    def _():
        acc_ref[...] = acc_ref[...] + part

    @pl.when(k == pl.num_programs(1) - 1)
    def _():
        o_ref[...] = _bn_relu_f32(acc_ref[...], gb_ref).astype(o_ref.dtype)


def prepare_linear_block_params(weight, bias, gamma, beta,
                                *, matmul_dtype=jnp.bfloat16):
    """One-time parameter prep, hoisted out of the per-call path.

    weight: (n_out, n_input) in PyTorch nn.Linear layout.  Returns wt as
    (n_input, n_out) in `matmul_dtype` (lane-dense) and gb = stacked
    [gamma; beta] as (2, n_out) f32.  The linear bias is dropped: it is added
    uniformly to every row of a feature column and cancels exactly in
    training-mode BatchNorm's (y - mean).
    """
    del bias  # mathematically redundant under training-mode BatchNorm1d
    n_out = weight.shape[0]
    wt = jnp.asarray(weight).T.astype(matmul_dtype)            # (n_input, n_out)
    gb = jnp.stack([jnp.asarray(gamma, jnp.float32).reshape(n_out),
                    jnp.asarray(beta, jnp.float32).reshape(n_out)], axis=0)
    return wt, gb


def _vmem_cap_bytes():
    """~75% of per-core VMEM (headroom for Mosaic internal scratch / spill)."""
    try:
        cap = int(pltpu.get_tpu_info().vmem_capacity_bytes)
    except Exception:
        cap = 64 * 1024 * 1024  # conservative default (v7x per-TensorCore)
    return (cap * 3) // 4


def linear_block(x, wt, gb, *, tn=256, matmul_dtype=jnp.bfloat16,
                 force_tk=None):
    """x: (B, n_input); wt: (n_input, n_out) pre-transposed; gb: (2, n_out) f32."""
    B, n_input = x.shape
    n_out = wt.shape[1]
    out_dtype = x.dtype

    # Feature tile: lane-dense, and >=2 blocks when n_out >= 512 so both v7x
    # TensorCores get work on the parallel axis.
    tn = min(tn, n_out)
    if n_out >= 512:
        tn = min(tn, n_out // 2)
    assert n_out % tn == 0, "n_out must be divisible by the feature tile tn"
    grid_j = n_out // tn

    # Cast x in the wrapper only when it is re-streamed many times; otherwise
    # the (cheap, MXU-hidden) cast happens inside the kernel.
    if grid_j > 2 and x.dtype != matmul_dtype:
        x = x.astype(matmul_dtype)
    x_bytes = jnp.dtype(x.dtype).itemsize
    mm_bytes = jnp.dtype(matmul_dtype).itemsize
    out_bytes = jnp.dtype(out_dtype).itemsize

    vmem_cap = _vmem_cap_bytes()

    # Adaptive K tile: keep the double-buffered x slab + W tile within ~half
    # the VMEM budget; multiple of 128 (MXU depth / layout friendly).
    if force_tk is not None:
        tk = force_tk
    else:
        stream_budget = vmem_cap // 2
        denom = 2 * (B * x_bytes + tn * mm_bytes)
        tk_cap = max(128, (stream_budget // denom) // 128 * 128)
        if n_input <= tk_cap:
            tk = n_input
        else:
            tk = 0
            t = tk_cap
            while t >= 128:
                if n_input % t == 0:
                    tk = t
                    break
                t -= 128
            if tk == 0:
                tk = n_input  # no 128-granular divisor; fall back to full K
    assert n_input % tk == 0, "n_input must be divisible by the K tile tk"
    grid_k = n_input // tk

    # Honest VMEM estimate (per-spec double buffering; accumulator only when
    # the K axis is actually split).
    vmem_est = (2 * B * tk * x_bytes          # x  (double-buffered)
                + 2 * tk * tn * mm_bytes      # Wt (double-buffered)
                + 2 * 2 * tn * 4              # gamma/beta
                + 2 * B * tn * out_bytes)     # out (double-buffered)
    if grid_k > 1:
        vmem_est += B * tn * 4                # resident f32 accumulator
    vmem_limit = int(min(max(2 * vmem_est, 32 * 1024 * 1024), vmem_cap))

    if grid_k == 1:
        # Single-K-step fast path: no scratch accumulator at all.
        return pl.pallas_call(
            linear_bn_relu_kernel_1k,
            out_shape=jax.ShapeDtypeStruct((B, n_out), out_dtype),
            grid_spec=pltpu.PrefetchScalarGridSpec(
                num_scalar_prefetch=0,
                grid=(grid_j,),
                in_specs=[
                    pl.BlockSpec((B, n_input), lambda j: (0, 0)),   # x (full K)
                    pl.BlockSpec((n_input, tn), lambda j: (0, j)),  # Wt tile
                    pl.BlockSpec((2, tn), lambda j: (0, j)),        # [gamma;beta]
                ],
                out_specs=pl.BlockSpec((B, tn), lambda j: (0, j)),
            ),
            compiler_params=pltpu.CompilerParams(
                dimension_semantics=("parallel",),
                vmem_limit_bytes=vmem_limit,
            ),
        )(x, wt, gb)

    return pl.pallas_call(
        linear_bn_relu_kernel_multik,
        out_shape=jax.ShapeDtypeStruct((B, n_out), out_dtype),
        grid_spec=pltpu.PrefetchScalarGridSpec(
            num_scalar_prefetch=0,
            grid=(grid_j, grid_k),
            in_specs=[
                pl.BlockSpec((B, tk), lambda j, k: (0, k)),     # x K-slab
                pl.BlockSpec((tk, tn), lambda j, k: (k, j)),    # Wt tile
                pl.BlockSpec((2, tn), lambda j, k: (0, j)),     # [gamma;beta]
            ],
            out_specs=pl.BlockSpec((B, tn), lambda j, k: (0, j)),
            scratch_shapes=[pltpu.VMEM((B, tn), jnp.float32)],
        ),
        compiler_params=pltpu.CompilerParams(
            dimension_semantics=("parallel", "arbitrary"),
            vmem_limit_bytes=vmem_limit,
        ),
    )(x, wt, gb)


def reference(x, weight, bias, gamma, beta):
    """Pure-JAX f32 reference mirroring PyTorch Linear->BatchNorm1d(train)->ReLU.
    Keeps the linear bias to demonstrate that dropping it in the kernel is exact."""
    y = x @ weight.T + bias
    mean = jnp.mean(y, axis=0, keepdims=True)
    var = jnp.mean((y - mean) ** 2, axis=0, keepdims=True)
    y_hat = (y - mean) / jnp.sqrt(var + EPS)
    return jnp.maximum(y_hat * gamma + beta, 0.0)


if __name__ == "__main__":
    key = jax.random.PRNGKey(0)

    # --- Case 1: single-K-step path (no scratch accumulator) ----------------
    B, n_input, n_out = 16, 64, 256
    k1, k2, k3, k4 = jax.random.split(key, 4)
    x = jax.random.normal(k1, (B, n_input), dtype=jnp.float32)
    bound = 1.0 / (n_input ** 0.5)
    weight = jax.random.uniform(k2, (n_out, n_input), jnp.float32, -bound, bound)
    bias = jax.random.uniform(k3, (n_out,), jnp.float32, -bound, bound)
    gamma = jnp.ones((n_out,), jnp.float32)   # BatchNorm1d default affine init
    beta = jnp.zeros((n_out,), jnp.float32)

    ref = reference(x, weight, bias, gamma, beta)

    # f32 matmul path: tight check (also proves bias-drop is exact).
    wt32, gb = prepare_linear_block_params(weight, bias, gamma, beta,
                                           matmul_dtype=jnp.float32)
    out32 = jax.block_until_ready(
        linear_block(x, wt32, gb, matmul_dtype=jnp.float32))
    assert out32.shape == (B, n_out)
    assert jnp.allclose(out32, ref, atol=1e-3, rtol=1e-3), "f32 kernel mismatch"

    # bf16 matmul path (default, fast): looser tolerance, BN math still f32.
    wt16, gb16 = prepare_linear_block_params(weight, bias, gamma, beta)
    out16 = jax.block_until_ready(linear_block(x, wt16, gb16))
    assert out16.shape == (B, n_out)
    assert jnp.allclose(out16, ref, atol=5e-2, rtol=5e-2), "bf16 kernel mismatch"

    # --- Case 2: multi-K-step path (resident f32 accumulator) ---------------
    B2, n_input2, n_out2 = 16, 256, 256
    k5, k6, k7, k8, k9 = jax.random.split(k4, 5)
    x2 = jax.random.normal(k5, (B2, n_input2), dtype=jnp.float32)
    bound2 = 1.0 / (n_input2 ** 0.5)
    weight2 = jax.random.uniform(k6, (n_out2, n_input2), jnp.float32,
                                 -bound2, bound2)
    bias2 = jax.random.uniform(k7, (n_out2,), jnp.float32, -bound2, bound2)
    gamma2 = jax.random.uniform(k8, (n_out2,), jnp.float32, 0.5, 1.5)
    beta2 = 0.1 * jax.random.normal(k9, (n_out2,), jnp.float32)

    ref2 = reference(x2, weight2, bias2, gamma2, beta2)
    wt2, gb2 = prepare_linear_block_params(weight2, bias2, gamma2, beta2,
                                           matmul_dtype=jnp.float32)
    out2 = jax.block_until_ready(
        linear_block(x2, wt2, gb2, matmul_dtype=jnp.float32, force_tk=128))
    assert out2.shape == (B2, n_out2)
    assert jnp.allclose(out2, ref2, atol=1e-3, rtol=1e-3), "multi-K kernel mismatch"

    print("KERNEL_OK")
</pallas_src>

<mosaic_0001>
module attributes {stable_mosaic.version = 11 : i64} {
  func.func @linear_bn_relu_kernel_1k(%arg0: i32, %arg1: memref<16x64xf32, #tpu.memory_space<vmem>>, %arg2: memref<64x256xf32, #tpu.memory_space<vmem>>, %arg3: memref<2x256xf32, #tpu.memory_space<vmem>>, %arg4: memref<16x256xf32, #tpu.memory_space<vmem>>) attributes {dimension_semantics = [#tpu.dimension_semantics<parallel>], iteration_bounds = array<i64: 1>, scalar_prefetch = 0 : i64, scratch_operands = 0 : i64, tpu.core_type = #tpu.core_type<tc>, window_params = [{pipeline_mode = #tpu.pipeline_mode<synchronous>, transform_indices = @transform_0, window_bounds = array<i64: 16, 64>}, {transform_indices = @transform_1, window_bounds = array<i64: 64, 256>}, {transform_indices = @transform_2, window_bounds = array<i64: 2, 256>}, {transform_indices = @transform_3, window_bounds = array<i64: 16, 256>}]} {
    %c0 = arith.constant 0 : index
    %c0_0 = arith.constant 0 : index
    %0 = vector.load %arg1[%c0, %c0_0] : memref<16x64xf32, #tpu.memory_space<vmem>>, vector<16x64xf32>
    %c0_1 = arith.constant 0 : index
    %c0_2 = arith.constant 0 : index
    %1 = vector.load %arg2[%c0_1, %c0_2] : memref<64x256xf32, #tpu.memory_space<vmem>>, vector<64x256xf32>
    %cst = arith.constant dense<0.000000e+00> : vector<16x256xf32>
    %2 = tpu.matmul %0, %1, %cst {dimension_numbers = #tpu.dot_dimension_numbers<[1], [0], [0], [1], [0, 0, 1, 1], [], []>} : vector<16x64xf32>, vector<64x256xf32>, vector<16x256xf32> -> vector<16x256xf32>
    %cst_3 = arith.constant dense<0.000000e+00> : vector<256xf32>
    %3 = vector.multi_reduction <add>, %2, %cst_3 [0] : vector<16x256xf32> to vector<256xf32>
    %4 = vector.shape_cast %3 : vector<256xf32> to vector<1x256xf32>
    %cst_4 = arith.constant 6.250000e-02 : f32
    %5 = vector.broadcast %cst_4 : f32 to vector<1x256xf32>
    %6 = arith.mulf %4, %5 : vector<1x256xf32>
    %7 = arith.mulf %2, %2 : vector<16x256xf32>
    %cst_5 = arith.constant dense<0.000000e+00> : vector<256xf32>
    %8 = vector.multi_reduction <add>, %7, %cst_5 [0] : vector<16x256xf32> to vector<256xf32>
    %9 = vector.shape_cast %8 : vector<256xf32> to vector<1x256xf32>
    %cst_6 = arith.constant 6.250000e-02 : f32
    %10 = vector.broadcast %cst_6 : f32 to vector<1x256xf32>
    %11 = arith.mulf %9, %10 : vector<1x256xf32>
    %12 = arith.mulf %6, %6 : vector<1x256xf32>
    %13 = arith.subf %11, %12 : vector<1x256xf32>
    %cst_7 = arith.constant 0.000000e+00 : f32
    %14 = vector.broadcast %cst_7 : f32 to vector<1x256xf32>
    %15 = arith.maximumf %13, %14 : vector<1x256xf32>
    %c0_8 = arith.constant 0 : index
    %c0_9 = arith.constant 0 : index
    %16 = vector.load %arg3[%c0_8, %c0_9] : memref<2x256xf32, #tpu.memory_space<vmem>>, vector<1x256xf32>
    %c1 = arith.constant 1 : index
    %c0_10 = arith.constant 0 : index
    %17 = vector.load %arg3[%c1, %c0_10] : memref<2x256xf32, #tpu.memory_space<vmem>>, vector<1x256xf32>
    %cst_11 = arith.constant 9.99999974E-6 : f32
    %18 = vector.broadcast %cst_11 : f32 to vector<1x256xf32>
    %19 = arith.addf %15, %18 : vector<1x256xf32>
    %20 = math.rsqrt %19 : vector<1x256xf32>
    %21 = arith.mulf %16, %20 : vector<1x256xf32>
    %22 = arith.mulf %6, %21 : vector<1x256xf32>
    %23 = arith.subf %17, %22 : vector<1x256xf32>
    %24 = vector.broadcast %21 : vector<1x256xf32> to vector<16x256xf32>
    %25 = arith.mulf %2, %24 : vector<16x256xf32>
    %26 = vector.broadcast %23 : vector<1x256xf32> to vector<16x256xf32>
    %27 = arith.addf %25, %26 : vector<16x256xf32>
    %cst_12 = arith.constant 0.000000e+00 : f32
    %28 = vector.broadcast %cst_12 : f32 to vector<16x256xf32>
    %29 = arith.maximumf %27, %28 : vector<16x256xf32>
    %c0_13 = arith.constant 0 : index
    %c0_14 = arith.constant 0 : index
    %30 = vector.load %arg4[%c0_13, %c0_14] : memref<16x256xf32, #tpu.memory_space<vmem>>, vector<16x256xf32>
    tpu.vector_store %arg4[%c0_13, %c0_14], %29 {strides = array<i32>} : memref<16x256xf32, #tpu.memory_space<vmem>>, vector<16x256xf32>,
    return
  }
  func.func @transform_0(%arg0: i32) -> (i32, i32) {
    %c0_i32 = arith.constant 0 : i32
    %c0_i32_0 = arith.constant 0 : i32
    %c0_i32_1 = arith.constant 0 : i32
    return %c0_i32, %c0_i32_0 : i32, i32
  }
  func.func @transform_1(%arg0: i32) -> (i32, i32) {
    %c0_i32 = arith.constant 0 : i32
    %c0_i32_0 = arith.constant 0 : i32
    return %c0_i32, %arg0 : i32, i32
  }
  func.func @transform_2(%arg0: i32) -> (i32, i32) {
    %c0_i32 = arith.constant 0 : i32
    %c0_i32_0 = arith.constant 0 : i32
    return %c0_i32, %arg0 : i32, i32
  }
  func.func @transform_3(%arg0: i32) -> (i32, i32) {
    %c0_i32 = arith.constant 0 : i32
    %c0_i32_0 = arith.constant 0 : i32
    return %c0_i32, %arg0 : i32, i32
  }
}

</mosaic_0001>

<llo_original>
// kernel: tpu_custom_call.1
$region0: #{tpu_custom_call.1}
  #allocation0 [shape = 'u32[]', space=smem, size = 0x4, offset = 0x4, fixed_abs, tag = 'smem constant byte address 0x4 - core index']
  #allocation1 [shape = 'u32[144,128]{1,0:T(1,128)}', space=vmem, size = 0x12000, scoped, tag = 'internal scratch']
  %s0 = inlined_call_operand.hbm [shape: f32[16,64], index: 0, kind: input, shape index: {}]
  %s1 = inlined_call_operand.hbm [shape: f32[64,256], index: 1, kind: input, shape index: {}]
  %s2 = inlined_call_operand.vmem [shape: f32[2,256], index: 2, kind: input, shape index: {}]
  %s3 = inlined_call_operand.hbm [shape: f32[16,256], index: 3, kind: output, shape index: {}]
  %s4 = sld [smem:[#allocation0]]
  $region30: #{tpu_custom_call.1} parent=0
    _
  %s6 = ssub.s32 1, %s4
  %s7 = scalar_select 0, %s6, %s4
  $region1: #{tpu_custom_call.1} parent=0
    #allocation2 [shape = 'u8[8192]{0}', space=vmem, size = 0x2000, scoped, tag = 'input window, operand 0, single buffered']
    #allocation3 [shape = 's32[1]{0}', space=sflag, size = 0x4, scoped, tag = 'scoped memory for tpu_custom_call.1']
    #allocation4 [shape = 's32[1]{0}', space=sflag, size = 0x4, scoped, tag = 'scoped memory for tpu_custom_call.1']
    #allocation5 [shape = 'u8[65536]{0}', space=vmem, size = 0x10000, scoped, tag = 'input window, operand 1, single buffered']
    #allocation6 [shape = 's32[1]{0}', space=sflag, size = 0x4, scoped, tag = 'scoped memory for tpu_custom_call.1']
    #allocation7 [shape = 'u8[16384]{0}', space=vmem, size = 0x4000, scoped, tag = 'output window, operand 0, single buffered']
    %8 = vsyncpa [#allocation3], 0
    %9 = vsyncpa [#allocation6], 0
    %10 = vsyncpa [#allocation4], 0
    // Predicated region
    $region2: #{tpu_custom_call.1} parent=1 // pred_check
      _
    $region3: #{tpu_custom_call.1} parent=1 // pred_check_branch
      %12 = sbr.rel (0) target = $region5
    $region4: #{tpu_custom_call.1} parent=1 // pred_region
      %s14 = ssub.s32 256, 256
      %15 = vsyncadd [#allocation3], %s14
      %s16 = sshll.u32 [#allocation2], 4
      %s17 = int_to_ptr.vmem [resolvable:$true] %s16
      %22 = dma.hbm_to_vmem [thread:$0]  %s0, 256, %s17, [#allocation3], 128, 128, 8
    $region5: #{tpu_custom_call.1} parent=1 // pred_fallthru
      _
    // Predicated region
    $region6: #{tpu_custom_call.1} parent=1 // pred_check
      _
    $region7: #{tpu_custom_call.1} parent=1 // pred_check_branch
      %24 = sbr.rel (0) target = $region9
    $region8: #{tpu_custom_call.1} parent=1 // pred_region
      %s26 = ssub.s32 2048, 2048
      %27 = vsyncadd [#allocation6], %s26
      %s28 = sshll.u32 [#allocation5], 4
      %s29 = int_to_ptr.vmem [resolvable:$true] %s28
      %34 = dma.hbm_to_vmem [thread:$0]  %s1, 2048, %s29, [#allocation6], 256, 256, 16
    $region9: #{tpu_custom_call.1} parent=1 // pred_fallthru
      _
    // Predicated region
    $region10: #{tpu_custom_call.1} parent=1 // pred_check
      _
    $region11: #{tpu_custom_call.1} parent=1 // pred_check_branch
      %36 = sbr.rel (0) target = $region13
    $region12: #{tpu_custom_call.1} parent=1 // pred_region
      _
    $region13: #{tpu_custom_call.1} parent=1 // pred_fallthru
      _
    // Predicated region
    $region14: #{tpu_custom_call.1} parent=1 // pred_check
      _
    $region15: #{tpu_custom_call.1} parent=1 // pred_check_branch
      %38 = sbr.rel (0) target = $region17
    $region16: #{tpu_custom_call.1} parent=1 // pred_region
      %39 = dma.done [#allocation3], 256
    $region17: #{tpu_custom_call.1} parent=1 // pred_fallthru
      _
    // Predicated region
    $region18: #{tpu_custom_call.1} parent=1 // pred_check
      _
    $region19: #{tpu_custom_call.1} parent=1 // pred_check_branch
      %41 = sbr.rel (0) target = $region21
    $region20: #{tpu_custom_call.1} parent=1 // pred_region
      %42 = dma.done [#allocation6], 2048
    $region21: #{tpu_custom_call.1} parent=1 // pred_fallthru
      _
    %v43 = vld [vmem:[#allocation2] sm:$0xff]
    %v44 = vld [vmem:[#allocation2 + $0x8] sm:$0xff]
    %v45 = vld [vmem:[#allocation5] sm:$0xff]
    %v46 = vld [vmem:[#allocation5 + $0x8] sm:$0xff]
    %v47 = vld [vmem:[#allocation5 + $0x10] sm:$0xff]
    %v48 = vld [vmem:[#allocation5 + $0x18] sm:$0xff]
    %v49 = vld [vmem:[#allocation5 + $0x20] sm:$0xff]
    %v50 = vld [vmem:[#allocation5 + $0x28] sm:$0xff]
    %v51 = vld [vmem:[#allocation5 + $0x30] sm:$0xff]
    %v52 = vld [vmem:[#allocation5 + $0x38] sm:$0xff]
    %v53 = vld [vmem:[#allocation5 + $0x40] sm:$0xff]
    %v54 = vld [vmem:[#allocation5 + $0x48] sm:$0xff]
    %v55 = vld [vmem:[#allocation5 + $0x50] sm:$0xff]
    %v56 = vld [vmem:[#allocation5 + $0x58] sm:$0xff]
    %v57 = vld [vmem:[#allocation5 + $0x60] sm:$0xff]
    %v58 = vld [vmem:[#allocation5 + $0x68] sm:$0xff]
    %v59 = vld [vmem:[#allocation5 + $0x70] sm:$0xff]
    %v60 = vld [vmem:[#allocation5 + $0x78] sm:$0xff]
    %vm61 = vcmask 523264
    %v63 = vsel %vm61, %v43, 0
    %v66 = vsel %vm61, %v44, 0
    %68 = vmatprep.subr.mxu0 %v46
    %69 = vmatpush1.msra.mxu0 %v45
    %70 = vmatprep.subr.mxu0 %v48
    %71 = vmatpush1.msra.mxu0 %v47
    %72 = vmatprep.subr.mxu0 %v50
    %73 = vmatpush1.msra.mxu0 %v49
    %74 = vmatprep.subr.mxu0 %v52
    %75 = vmatpush1.msra.mxu0 %v51
    %76 = vmatprep.subr.mxu0 %v54
    %77 = vmatpush1.msra.mxu0 %v53
    %78 = vmatprep.subr.mxu0 %v56
    %79 = vmatpush1.msra.mxu0 %v55
    %80 = vmatprep.subr.mxu0 %v58
    %81 = vmatpush1.msra.mxu0 %v57
    %82 = vmatprep.subr.mxu0 %v60
    %83 = vmatpush1.msra.mxu0 %v59
    %84 = vmatprep.subr.mxu0 0.0
    %85 = vmatpush1.msra.mxu0 0.0
    %86 = vmatprep.subr.mxu0 0.0
    %87 = vmatpush1.msra.mxu0 0.0
    %88 = vmatprep.subr.mxu0 0.0
    %89 = vmatpush1.msra.mxu0 0.0
    %90 = vmatprep.subr.mxu0 0.0
    %91 = vmatpush1.msra.mxu0 0.0
    %92 = vmatprep.subr.mxu0 0.0
    %93 = vmatpush1.msra.mxu0 0.0
    %94 = vmatprep.subr.mxu0 0.0
    %95 = vmatpush1.msra.mxu0 0.0
    %96 = vmatprep.subr.mxu0 0.0
    %97 = vmatpush1.msra.mxu0 0.0
    %98 = vmatprep.subr.mxu0 0.0
    %99 = vmatpush1.msra.mxu0 0.0
    %100 = vmatprep.subr.mxu0 0.0
    %101 = vmatpush1.msra.mxu0 0.0
    %102 = vmatprep.subr.mxu0 0.0
    %103 = vmatpush1.msra.mxu0 0.0
    %104 = vmatprep.subr.mxu0 0.0
    %105 = vmatpush1.msra.mxu0 0.0
    %106 = vmatprep.subr.mxu0 0.0
    %107 = vmatpush1.msra.mxu0 0.0
    %108 = vmatprep.subr.mxu0 0.0
    %109 = vmatpush1.msra.mxu0 0.0
    %110 = vmatprep.subr.mxu0 0.0
    %111 = vmatpush1.msra.mxu0 0.0
    %112 = vmatprep.subr.mxu0 0.0
    %113 = vmatpush1.msra.mxu0 0.0
    %114 = vmatprep.subr.mxu0 0.0
    %115 = vmatpush1.msra.mxu0 0.0
    %116 = vmatprep.subr.mxu0 0.0
    %117 = vmatpush1.msra.mxu0 0.0
    %118 = vmatprep.subr.mxu0 0.0
    %119 = vmatpush1.msra.mxu0 0.0
    %120 = vmatprep.subr.mxu0 0.0
    %121 = vmatpush1.msra.mxu0 0.0
    %122 = vmatprep.subr.mxu0 0.0
    %123 = vmatpush1.msra.mxu0 0.0
    %124 = vmatprep.subr.mxu0 0.0
    %125 = vmatpush1.msra.mxu0 0.0
    %126 = vmatprep.subr.mxu0 0.0
    %127 = vmatpush1.msra.mxu0 0.0
    %128 = vmatprep.subr.mxu0 0.0
    %129 = vmatpush1.msra.mxu0 0.0
    %130 = vmatprep.subr.mxu0 0.0
    %131 = vmatpush1.msra.mxu0 0.0
    %132 = vmatprep.mubr.f32.mxu0 0.0
    %133 = vmatmul.mubr.f32.gmra.mrb[0].mxu0 %v63
    %v134 = vpop.f32.mrb[0].mxu0
    %v135 = vadd.f32 0.0, %v134
    %v136 = vpop.f32.mrb[0].mxu0
    %v137 = vadd.f32 0.0, %v136
    %138 = vmatprep.mubr.f32.mxu0 0.0
    %139 = vmatmul.mubr.f32.gmra.mrb[0].mxu0 %v66
    %v140 = vpop.f32.mrb[0].mxu0
    %v141 = vadd.f32 0.0, %v140
    %v142 = vpop.f32.mrb[0].mxu0
    %v143 = vadd.f32 0.0, %v142
    %144 = vdwg.mxu0
    %v145 = vadd.f32 %v135, %v141
    %v146 = vrot.slane %v145, 4
    %v147 = vadd.f32 %v145, %v146
    %v148 = vrot.slane %v147, 2
    %v149 = vadd.f32 %v147, %v148
    %v150 = vrot.slane %v149, 1
    %v151 = vadd.f32 %v149, %v150
    %v152 = vadd.f32 %v137, %v143
    %v153 = vrot.slane %v152, 4
    %v154 = vadd.f32 %v152, %v153
    %v155 = vrot.slane %v154, 2
    %v156 = vadd.f32 %v154, %v155
    %v157 = vrot.slane %v156, 1
    %v158 = vadd.f32 %v156, %v157
    %v159 = vmul.f32 %v151, 0.0625
    %v160 = vmul.f32 %v158, 0.0625
    %v161 = vmul.f32 %v135, %v135
    %v162 = vmul.f32 %v137, %v137
    %v163 = vmul.f32 %v141, %v141
    %v164 = vmul.f32 %v143, %v143
    %v165 = vadd.f32 %v161, %v163
    %v166 = vrot.slane %v165, 4
    %v167 = vadd.f32 %v165, %v166
    %v168 = vrot.slane %v167, 2
    %v169 = vadd.f32 %v167, %v168
    %v170 = vrot.slane %v169, 1
    %v171 = vadd.f32 %v169, %v170
    %v172 = vadd.f32 %v162, %v164
    %v173 = vrot.slane %v172, 4
    %v174 = vadd.f32 %v172, %v173
    %v175 = vrot.slane %v174, 2
    %v176 = vadd.f32 %v174, %v175
    %v177 = vrot.slane %v176, 1
    %v178 = vadd.f32 %v176, %v177
    %v179 = vmul.f32 %v171, 0.0625
    %v180 = vmul.f32 %v178, 0.0625
    %v181 = vmul.f32 %v159, %v159
    %v182 = vmul.f32 %v160, %v160
    %v183 = vsub.f32 %v179, %v181
    %v184 = vsub.f32 %v180, %v182
    %v185 = vmax.f32 %v183, 0.0
    %v186 = vmax.f32 %v184, 0.0
    %v187 = vld [vmem:[%s2] ss:$2 sm:$0x3]
    %s188 = scalar_lea.vmem %s2, 1
    %v189 = vld [vmem:[%s188] ss:$2 sm:$0x3]
    %v190 = vadd.f32 %v185, 1e-05
    %v191 = vadd.f32 %v186, 1e-05
    %v192 = vrsqrt.pop %v190
    %v193 = vrsqrt.pop %v191
    %v196 = vcombine.low %v192, %v193
    %v198 = vunpack.c.l.s4 1966171168
    %v199 = vunpack.c.0.s8 %v198
    %v200 = vlaneseq
    %v201 = vshrl.u32 %v200, 7
    %v202 = vsub.s32 %v199, %v201
    %v203 = vrot.slane %v196, %v202
    %v205 = vunpack.c.l.s4 1966171168
    %v206 = vunpack.c.0.s8 %v205
    %v207 = vlaneseq
    %v208 = vshrl.u32 %v207, 7
    %v209 = vsub.s32 %v206, %v208
    %v210 = vrot.slane %v203, %v209
    %v212 = vmul.f32 %v187, %v210
    %v214 = vlaneseq
    %v215 = vshrl.u32 %v214, 7
    %v216 = vsub.s32 0, %v215
    %v217 = vrot.slane %v212, %v216
    %v218 = vlaneseq
    %v219 = vshrl.u32 %v218, 7
    %v220 = vsub.s32 1, %v219
    %v221 = vrot.slane %v212, %v220
    %v224 = vmul.f32 %v159, %v217
    %v225 = vmul.f32 %v160, %v221
    %v228 = vcombine.low %v224, %v225
    %v230 = vunpack.c.l.s4 1966171168
    %v231 = vunpack.c.0.s8 %v230
    %v232 = vlaneseq
    %v233 = vshrl.u32 %v232, 7
    %v234 = vsub.s32 %v231, %v233
    %v235 = vrot.slane %v228, %v234
    %v237 = vunpack.c.l.s4 1966171168
    %v238 = vunpack.c.0.s8 %v237
    %v239 = vlaneseq
    %v240 = vshrl.u32 %v239, 7
    %v241 = vsub.s32 %v238, %v240
    %v242 = vrot.slane %v235, %v241
    %v244 = vsub.f32 %v189, %v242
    %v245 = vmul.f32 %v135, %v217
    %v246 = vmul.f32 %v137, %v221
    %v247 = vmul.f32 %v141, %v217
    %v248 = vmul.f32 %v143, %v221
    %v250 = vlaneseq
    %v251 = vshrl.u32 %v250, 7
    %v252 = vsub.s32 0, %v251
    %v253 = vrot.slane %v244, %v252
    %v254 = vlaneseq
    %v255 = vshrl.u32 %v254, 7
    %v256 = vsub.s32 1, %v255
    %v257 = vrot.slane %v244, %v256
    %v260 = vadd.f32 %v245, %v253
    %v261 = vadd.f32 %v246, %v257
    %v262 = vadd.f32 %v247, %v253
    %v263 = vadd.f32 %v248, %v257
    %v264 = vmax.f32 %v260, 0.0
    %v265 = vmax.f32 %v261, 0.0
    %v266 = vmax.f32 %v262, 0.0
    %v267 = vmax.f32 %v263, 0.0
    %268 = vst [vmem:[#allocation7] sm:$0xff] %v264
    %269 = vst [vmem:[#allocation7 + $0x8] sm:$0xff] %v265
    %270 = vst [vmem:[#allocation7 + $0x10] sm:$0xff] %v266
    %271 = vst [vmem:[#allocation7 + $0x18] sm:$0xff] %v267
    // Predicated region
    $region22: #{tpu_custom_call.1} parent=1 // pred_check
      _
    $region23: #{tpu_custom_call.1} parent=1 // pred_check_branch
      %273 = sbr.rel (0) target = $region25
    $region24: #{tpu_custom_call.1} parent=1 // pred_region
      %s275 = ssub.s32 512, 512
      %276 = vsyncadd [#allocation4], %s275
      %s277 = sshll.u32 [#allocation7], 4
      %s278 = int_to_ptr.vmem [resolvable:$true] %s277
      %283 = dma.vmem_to_hbm [thread:$0]  %s278, 512, %s3, [#allocation4], 256, 256, 16
    $region25: #{tpu_custom_call.1} parent=1 // pred_fallthru
      _
    // Predicated region
    $region26: #{tpu_custom_call.1} parent=1 // pred_check
      _
    $region27: #{tpu_custom_call.1} parent=1 // pred_check_branch
      %285 = sbr.rel (0) target = $region29
    $region28: #{tpu_custom_call.1} parent=1 // pred_region
      %286 = dma.done [#allocation4], 512
    $region29: #{tpu_custom_call.1} parent=1 // pred_fallthru
      _
    %287 = vsyncpa [#allocation3], 1
    %288 = vsyncpa [#allocation6], 1
    %289 = vsyncpa [#allocation4], 1

</llo_original>
